<compile_context>
chip_gen: v6e
topology: v6e:2x2x1
jax: 0.10.0
libtpu: 0.0.40
codegen_flags: <defaults>
</compile_context>

<pallas_src>
import math

import jax
import jax.numpy as jnp
from jax.experimental import pallas as pl
from jax.experimental.pallas import tpu as pltpu


IN_FEATURES = 8
OUT_FEATURES = 64
STACK = 16                     # 16*8 = 128 lane-dense input, 16*64 = 1024 lane-dense output
KIN = STACK * IN_FEATURES      # 128
KOUT = STACK * OUT_FEATURES    # 1024
TM_PACKED = 1024               # packed rows per grid step (= 16384 original rows)


def _round_up(x, m):
    return (x + m - 1) // m * m


def linear_hardswish_kernel(x_ref, w_ref, b_ref, o_ref):
    # (TMp, 128) @ (128, 1024) on the MXU, f32 accumulation.
    y = jnp.dot(x_ref[...], w_ref[...], preferred_element_type=jnp.float32)
    y = y + b_ref[...]
    # hard-swish: y * clamp(y + 3, 0, 6) / 6  ==  y * clamp(y/6 + 0.5, 0, 1)
    gate = jnp.minimum(jnp.maximum(y * (1.0 / 6.0) + 0.5, 0.0), 1.0)
    o_ref[...] = (y * gate).astype(o_ref.dtype)


def prepare_params(w, b):
    """Precompute ONCE the block-diagonal weight and tiled bias used by the kernel.

    w: (in=8, out=64)  [transposed vs torch Linear.weight], b: (64,).
    """
    w_bd = jnp.kron(jnp.eye(STACK, dtype=w.dtype), w)           # (128, 1024)
    b_bd = jnp.tile(b, STACK).reshape(1, KOUT)                  # (1, 1024)
    return w_bd, b_bd


@jax.jit
def linear_hardswish(x, w_bd, b_bd):
    """x: (..., 8), w_bd: (128, 1024) block-diagonal, b_bd: (1, 1024) -> (..., 64)."""
    lead_shape = x.shape[:-1]
    M = math.prod(lead_shape)
    x2d = x.reshape(M, IN_FEATURES)

    # Packed-row geometry: STACK original rows per packed (lane-dense) row.
    mp = pl.cdiv(M, STACK)                 # packed rows holding real data
    mp_pad = _round_up(mp, 8)              # sublane alignment only (<= 7 extra packed rows)
    m_pad = mp_pad * STACK

    if m_pad != M:                         # tiny pad; skipped entirely when M % 128 == 0
        x2d = jnp.pad(x2d, ((0, m_pad - M), (0, 0)))
    x_packed = x2d.reshape(mp_pad, KIN)    # (Mp, 128), contiguous, lane-dense

    # Tile height: at most TM_PACKED, and split the work at least two ways when possible
    # so both v7x TensorCores get a grid step (harmless on single-TC v5e/v6e).
    tmp = min(TM_PACKED, max(8, _round_up(pl.cdiv(mp_pad, 2), 8)))
    grid = (pl.cdiv(mp_pad, tmp),)         # last block may be a partial boundary block

    cost = pl.CostEstimate(
        flops=2 * mp_pad * KIN * KOUT,
        transcendentals=0,
        bytes_accessed=4 * (mp_pad * (KIN + KOUT) + KIN * KOUT + KOUT),
    )

    out_packed = pl.pallas_call(
        linear_hardswish_kernel,
        out_shape=jax.ShapeDtypeStruct((mp_pad, KOUT), x.dtype),
        grid_spec=pltpu.PrefetchScalarGridSpec(
            num_scalar_prefetch=0,
            grid=grid,
            in_specs=[
                pl.BlockSpec((tmp, KIN), lambda i: (i, 0)),    # row tiles, pipelined DMA
                pl.BlockSpec((KIN, KOUT), lambda i: (0, 0)),   # weights stay resident
                pl.BlockSpec((1, KOUT), lambda i: (0, 0)),     # bias stays resident
            ],
            out_specs=pl.BlockSpec((tmp, KOUT), lambda i: (i, 0)),
        ),
        compiler_params=pltpu.CompilerParams(
            dimension_semantics=("parallel",),      # independent row tiles -> megacore split
            vmem_limit_bytes=32 * 1024 * 1024,      # ~9.6 MiB actually used at tmp=1024
        ),
        cost_estimate=cost,
    )(x_packed, w_bd, b_bd)

    out = out_packed.reshape(m_pad, OUT_FEATURES)
    if m_pad != M:                         # only in the ragged case; aligned case is copy-free
        out = out[:M]
    return out.reshape(*lead_shape, OUT_FEATURES)


def reference(x, w, b):
    y1 = jnp.dot(x, w) + b
    y2 = y1 * jnp.clip(y1 + 3.0, 0.0, 6.0)
    return y2 / 6.0


if __name__ == "__main__":
    key = jax.random.PRNGKey(0)
    k_x, k_w, k_b, k_x2, k_x3 = jax.random.split(key, 5)

    # Deterministic parameter init (uniform bound, like torch Linear's default init)
    bound = 1.0 / math.sqrt(IN_FEATURES)
    w = jax.random.uniform(k_w, (IN_FEATURES, OUT_FEATURES), jnp.float32, -bound, bound)
    b = jax.random.uniform(k_b, (OUT_FEATURES,), jnp.float32, -bound, bound)

    # Block-diagonal params built once, reused across calls.
    w_bd, b_bd = prepare_params(w, b)

    # Small shape consistent with Linear(8 -> 64): (batch, seq, in_features)
    x = jax.random.normal(k_x, (2, 16, IN_FEATURES), jnp.float32)
    out = jax.block_until_ready(linear_hardswish(x, w_bd, b_bd))
    assert out.shape == (2, 16, OUT_FEATURES), out.shape
    assert jnp.allclose(out, reference(x, w, b), atol=1e-5, rtol=1e-5), "mismatch (small)"

    # Ragged row count (M=111) exercises the sublane pad + boundary-block path.
    x_rag = jax.random.normal(k_x3, (3, 37, IN_FEATURES), jnp.float32)
    out_rag = jax.block_until_ready(linear_hardswish(x_rag, w_bd, b_bd))
    assert out_rag.shape == (3, 37, OUT_FEATURES), out_rag.shape
    assert jnp.allclose(out_rag, reference(x_rag, w, b), atol=1e-5, rtol=1e-5), "mismatch (ragged)"

    # Larger, aligned row count: multi-step grid (>=2 tiles), zero pad/slice copies.
    x_big = jax.random.normal(k_x2, (4, 4096, IN_FEATURES), jnp.float32)
    out_big = jax.block_until_ready(linear_hardswish(x_big, w_bd, b_bd))
    assert out_big.shape == (4, 4096, OUT_FEATURES), out_big.shape
    assert jnp.allclose(out_big, reference(x_big, w, b), atol=1e-5, rtol=1e-5), "mismatch (big)"

    print("KERNEL_OK")
</pallas_src>

<mosaic_0001>
module attributes {stable_mosaic.version = 11 : i64} {
  func.func @linear_hardswish_kernel(%arg0: i32, %arg1: memref<8x128xf32, #tpu.memory_space<vmem>>, %arg2: memref<128x1024xf32, #tpu.memory_space<vmem>>, %arg3: memref<1x1024xf32, #tpu.memory_space<vmem>>, %arg4: memref<8x1024xf32, #tpu.memory_space<vmem>>) attributes {dimension_semantics = [#tpu.dimension_semantics<parallel>], iteration_bounds = array<i64: 1>, scalar_prefetch = 0 : i64, scratch_operands = 0 : i64, tpu.core_type = #tpu.core_type<tc>, window_params = [{transform_indices = @transform_0, window_bounds = array<i64: 8, 128>}, {pipeline_mode = #tpu.pipeline_mode<synchronous>, transform_indices = @transform_1, window_bounds = array<i64: 128, 1024>}, {pipeline_mode = #tpu.pipeline_mode<synchronous>, transform_indices = @transform_2, window_bounds = array<i64: 1, 1024>}, {transform_indices = @transform_3, window_bounds = array<i64: 8, 1024>}]} {
    %c0 = arith.constant 0 : index
    %c0_0 = arith.constant 0 : index
    %0 = vector.load %arg1[%c0, %c0_0] : memref<8x128xf32, #tpu.memory_space<vmem>>, vector<8x128xf32>
    %c0_1 = arith.constant 0 : index
    %c0_2 = arith.constant 0 : index
    %1 = vector.load %arg2[%c0_1, %c0_2] : memref<128x1024xf32, #tpu.memory_space<vmem>>, vector<128x1024xf32>
    %cst = arith.constant dense<0.000000e+00> : vector<8x1024xf32>
    %2 = tpu.matmul %0, %1, %cst {dimension_numbers = #tpu.dot_dimension_numbers<[1], [0], [0], [1], [0, 0, 1, 1], [], []>} : vector<8x128xf32>, vector<128x1024xf32>, vector<8x1024xf32> -> vector<8x1024xf32>
    %c0_3 = arith.constant 0 : index
    %c0_4 = arith.constant 0 : index
    %3 = vector.load %arg3[%c0_3, %c0_4] : memref<1x1024xf32, #tpu.memory_space<vmem>>, vector<1x1024xf32>
    %4 = vector.broadcast %3 : vector<1x1024xf32> to vector<8x1024xf32>
    %5 = arith.addf %2, %4 : vector<8x1024xf32>
    %cst_5 = arith.constant 0.166666672 : f32
    %6 = vector.broadcast %cst_5 : f32 to vector<8x1024xf32>
    %7 = arith.mulf %5, %6 : vector<8x1024xf32>
    %cst_6 = arith.constant 5.000000e-01 : f32
    %8 = vector.broadcast %cst_6 : f32 to vector<8x1024xf32>
    %9 = arith.addf %7, %8 : vector<8x1024xf32>
    %cst_7 = arith.constant 0.000000e+00 : f32
    %10 = vector.broadcast %cst_7 : f32 to vector<8x1024xf32>
    %11 = arith.maximumf %9, %10 : vector<8x1024xf32>
    %cst_8 = arith.constant 1.000000e+00 : f32
    %12 = vector.broadcast %cst_8 : f32 to vector<8x1024xf32>
    %13 = arith.minimumf %11, %12 : vector<8x1024xf32>
    %14 = arith.mulf %5, %13 : vector<8x1024xf32>
    %c0_9 = arith.constant 0 : index
    %c0_10 = arith.constant 0 : index
    %15 = vector.load %arg4[%c0_9, %c0_10] : memref<8x1024xf32, #tpu.memory_space<vmem>>, vector<8x1024xf32>
    tpu.vector_store %arg4[%c0_9, %c0_10], %14 {strides = array<i32>} : memref<8x1024xf32, #tpu.memory_space<vmem>>, vector<8x1024xf32>,
    return
  }
  func.func @transform_0(%arg0: i32) -> (i32, i32) {
    %c0_i32 = arith.constant 0 : i32
    %c0_i32_0 = arith.constant 0 : i32
    return %arg0, %c0_i32 : i32, i32
  }
  func.func @transform_1(%arg0: i32) -> (i32, i32) {
    %c0_i32 = arith.constant 0 : i32
    %c0_i32_0 = arith.constant 0 : i32
    %c0_i32_1 = arith.constant 0 : i32
    return %c0_i32, %c0_i32_0 : i32, i32
  }
  func.func @transform_2(%arg0: i32) -> (i32, i32) {
    %c0_i32 = arith.constant 0 : i32
    %c0_i32_0 = arith.constant 0 : i32
    %c0_i32_1 = arith.constant 0 : i32
    return %c0_i32, %c0_i32_0 : i32, i32
  }
  func.func @transform_3(%arg0: i32) -> (i32, i32) {
    %c0_i32 = arith.constant 0 : i32
    %c0_i32_0 = arith.constant 0 : i32
    return %arg0, %c0_i32 : i32, i32
  }
}

</mosaic_0001>

<llo_original>
// kernel: linear_hardswish.1
$region0: #{linear_hardswish.1}
  #allocation0 [shape = 'u32[]', space=smem, size = 0x4, offset = 0x4, fixed_abs, tag = 'smem constant byte address 0x4 - core index']
  #allocation1 [shape = 'u32[144,128]{1,0:T(1,128)}', space=vmem, size = 0x12000, scoped, tag = 'internal scratch']
  %s0 = inlined_call_operand.vmem [shape: f32[8,128], index: 0, kind: input, shape index: {}]
  %s1 = inlined_call_operand.hbm [shape: f32[128,1024], index: 1, kind: input, shape index: {}]
  %s2 = inlined_call_operand.vmem [shape: f32[1,1024], index: 2, kind: input, shape index: {}]
  %s3 = inlined_call_operand.vmem [shape: f32[8,1024], index: 3, kind: output, shape index: {}]
  %s4 = sld [smem:[#allocation0]]
  $region26: #{linear_hardswish.1} parent=0
    _
  %s6 = ssub.s32 1, %s4
  %s7 = scalar_select 0, %s6, %s4
  $region1: #{linear_hardswish.1} parent=0
    #allocation2 [shape = 'u8[524288]{0}', space=vmem, size = 0x80000, scoped, tag = 'input window, operand 1, single buffered']
    #allocation3 [shape = 's32[1]{0}', space=sflag, size = 0x4, scoped, tag = 'scoped memory for linear_hardswish.1']
    %8 = vsyncpa [#allocation3], 0
    // Predicated region
    $region2: #{linear_hardswish.1} parent=1 // pred_check
      _
    $region3: #{linear_hardswish.1} parent=1 // pred_check_branch
      %10 = sbr.rel (0) target = $region5
    $region4: #{linear_hardswish.1} parent=1 // pred_region
      _
    $region5: #{linear_hardswish.1} parent=1 // pred_fallthru
      _
    // Predicated region
    $region6: #{linear_hardswish.1} parent=1 // pred_check
      _
    $region7: #{linear_hardswish.1} parent=1 // pred_check_branch
      %12 = sbr.rel (0) target = $region9
    $region8: #{linear_hardswish.1} parent=1 // pred_region
      %s14 = ssub.s32 16384, 16384
      %15 = vsyncadd [#allocation3], %s14
      %s16 = sshll.u32 [#allocation2], 4
      %s17 = int_to_ptr.vmem [resolvable:$true] %s16
      %22 = dma.hbm_to_vmem [thread:$0]  %s1, 16384, %s17, [#allocation3], 1024, 1024, 64
    $region9: #{linear_hardswish.1} parent=1 // pred_fallthru
      _
    // Predicated region
    $region10: #{linear_hardswish.1} parent=1 // pred_check
      _
    $region11: #{linear_hardswish.1} parent=1 // pred_check_branch
      %24 = sbr.rel (0) target = $region13
    $region12: #{linear_hardswish.1} parent=1 // pred_region
      _
    $region13: #{linear_hardswish.1} parent=1 // pred_fallthru
      _
    // Predicated region
    $region14: #{linear_hardswish.1} parent=1 // pred_check
      _
    $region15: #{linear_hardswish.1} parent=1 // pred_check_branch
      %26 = sbr.rel (0) target = $region17
    $region16: #{linear_hardswish.1} parent=1 // pred_region
      %27 = dma.done [#allocation3], 16384
    $region17: #{linear_hardswish.1} parent=1 // pred_fallthru
      _
    %v28 = vld [vmem:[%s0] sm:$0xff]
    %v29 = vld [vmem:[#allocation2] sm:$0xff]
    %v30 = vld [vmem:[#allocation2 + $0x8] sm:$0xff]
    %v31 = vld [vmem:[#allocation2 + $0x10] sm:$0xff]
    %v32 = vld [vmem:[#allocation2 + $0x18] sm:$0xff]
    %v33 = vld [vmem:[#allocation2 + $0x20] sm:$0xff]
    %v34 = vld [vmem:[#allocation2 + $0x28] sm:$0xff]
    %v35 = vld [vmem:[#allocation2 + $0x30] sm:$0xff]
    %v36 = vld [vmem:[#allocation2 + $0x38] sm:$0xff]
    %v37 = vld [vmem:[#allocation2 + $0x40] sm:$0xff]
    %v38 = vld [vmem:[#allocation2 + $0x48] sm:$0xff]
    %v39 = vld [vmem:[#allocation2 + $0x50] sm:$0xff]
    %v40 = vld [vmem:[#allocation2 + $0x58] sm:$0xff]
    %v41 = vld [vmem:[#allocation2 + $0x60] sm:$0xff]
    %v42 = vld [vmem:[#allocation2 + $0x68] sm:$0xff]
    %v43 = vld [vmem:[#allocation2 + $0x70] sm:$0xff]
    %v44 = vld [vmem:[#allocation2 + $0x78] sm:$0xff]
    %v45 = vld [vmem:[#allocation2 + $0x80] sm:$0xff]
    %v46 = vld [vmem:[#allocation2 + $0x88] sm:$0xff]
    %v47 = vld [vmem:[#allocation2 + $0x90] sm:$0xff]
    %v48 = vld [vmem:[#allocation2 + $0x98] sm:$0xff]
    %v49 = vld [vmem:[#allocation2 + $0xa0] sm:$0xff]
    %v50 = vld [vmem:[#allocation2 + $0xa8] sm:$0xff]
    %v51 = vld [vmem:[#allocation2 + $0xb0] sm:$0xff]
    %v52 = vld [vmem:[#allocation2 + $0xb8] sm:$0xff]
    %v53 = vld [vmem:[#allocation2 + $0xc0] sm:$0xff]
    %v54 = vld [vmem:[#allocation2 + $0xc8] sm:$0xff]
    %v55 = vld [vmem:[#allocation2 + $0xd0] sm:$0xff]
    %v56 = vld [vmem:[#allocation2 + $0xd8] sm:$0xff]
    %v57 = vld [vmem:[#allocation2 + $0xe0] sm:$0xff]
    %v58 = vld [vmem:[#allocation2 + $0xe8] sm:$0xff]
    %v59 = vld [vmem:[#allocation2 + $0xf0] sm:$0xff]
    %v60 = vld [vmem:[#allocation2 + $0xf8] sm:$0xff]
    %v61 = vld [vmem:[#allocation2 + $0x100] sm:$0xff]
    %v62 = vld [vmem:[#allocation2 + $0x108] sm:$0xff]
    %v63 = vld [vmem:[#allocation2 + $0x110] sm:$0xff]
    %v64 = vld [vmem:[#allocation2 + $0x118] sm:$0xff]
    %v65 = vld [vmem:[#allocation2 + $0x120] sm:$0xff]
    %v66 = vld [vmem:[#allocation2 + $0x128] sm:$0xff]
    %v67 = vld [vmem:[#allocation2 + $0x130] sm:$0xff]
    %v68 = vld [vmem:[#allocation2 + $0x138] sm:$0xff]
    %v69 = vld [vmem:[#allocation2 + $0x140] sm:$0xff]
    %v70 = vld [vmem:[#allocation2 + $0x148] sm:$0xff]
    %v71 = vld [vmem:[#allocation2 + $0x150] sm:$0xff]
    %v72 = vld [vmem:[#allocation2 + $0x158] sm:$0xff]
    %v73 = vld [vmem:[#allocation2 + $0x160] sm:$0xff]
    %v74 = vld [vmem:[#allocation2 + $0x168] sm:$0xff]
    %v75 = vld [vmem:[#allocation2 + $0x170] sm:$0xff]
    %v76 = vld [vmem:[#allocation2 + $0x178] sm:$0xff]
    %v77 = vld [vmem:[#allocation2 + $0x180] sm:$0xff]
    %v78 = vld [vmem:[#allocation2 + $0x188] sm:$0xff]
    %v79 = vld [vmem:[#allocation2 + $0x190] sm:$0xff]
    %v80 = vld [vmem:[#allocation2 + $0x198] sm:$0xff]
    %v81 = vld [vmem:[#allocation2 + $0x1a0] sm:$0xff]
    %v82 = vld [vmem:[#allocation2 + $0x1a8] sm:$0xff]
    %v83 = vld [vmem:[#allocation2 + $0x1b0] sm:$0xff]
    %v84 = vld [vmem:[#allocation2 + $0x1b8] sm:$0xff]
    %v85 = vld [vmem:[#allocation2 + $0x1c0] sm:$0xff]
    %v86 = vld [vmem:[#allocation2 + $0x1c8] sm:$0xff]
    %v87 = vld [vmem:[#allocation2 + $0x1d0] sm:$0xff]
    %v88 = vld [vmem:[#allocation2 + $0x1d8] sm:$0xff]
    %v89 = vld [vmem:[#allocation2 + $0x1e0] sm:$0xff]
    %v90 = vld [vmem:[#allocation2 + $0x1e8] sm:$0xff]
    %v91 = vld [vmem:[#allocation2 + $0x1f0] sm:$0xff]
    %v92 = vld [vmem:[#allocation2 + $0x1f8] sm:$0xff]
    %v93 = vld [vmem:[#allocation2 + $0x200] sm:$0xff]
    %v94 = vld [vmem:[#allocation2 + $0x208] sm:$0xff]
    %v95 = vld [vmem:[#allocation2 + $0x210] sm:$0xff]
    %v96 = vld [vmem:[#allocation2 + $0x218] sm:$0xff]
    %v97 = vld [vmem:[#allocation2 + $0x220] sm:$0xff]
    %v98 = vld [vmem:[#allocation2 + $0x228] sm:$0xff]
    %v99 = vld [vmem:[#allocation2 + $0x230] sm:$0xff]
    %v100 = vld [vmem:[#allocation2 + $0x238] sm:$0xff]
    %v101 = vld [vmem:[#allocation2 + $0x240] sm:$0xff]
    %v102 = vld [vmem:[#allocation2 + $0x248] sm:$0xff]
    %v103 = vld [vmem:[#allocation2 + $0x250] sm:$0xff]
    %v104 = vld [vmem:[#allocation2 + $0x258] sm:$0xff]
    %v105 = vld [vmem:[#allocation2 + $0x260] sm:$0xff]
    %v106 = vld [vmem:[#allocation2 + $0x268] sm:$0xff]
    %v107 = vld [vmem:[#allocation2 + $0x270] sm:$0xff]
    %v108 = vld [vmem:[#allocation2 + $0x278] sm:$0xff]
    %v109 = vld [vmem:[#allocation2 + $0x280] sm:$0xff]
    %v110 = vld [vmem:[#allocation2 + $0x288] sm:$0xff]
    %v111 = vld [vmem:[#allocation2 + $0x290] sm:$0xff]
    %v112 = vld [vmem:[#allocation2 + $0x298] sm:$0xff]
    %v113 = vld [vmem:[#allocation2 + $0x2a0] sm:$0xff]
    %v114 = vld [vmem:[#allocation2 + $0x2a8] sm:$0xff]
    %v115 = vld [vmem:[#allocation2 + $0x2b0] sm:$0xff]
    %v116 = vld [vmem:[#allocation2 + $0x2b8] sm:$0xff]
    %v117 = vld [vmem:[#allocation2 + $0x2c0] sm:$0xff]
    %v118 = vld [vmem:[#allocation2 + $0x2c8] sm:$0xff]
    %v119 = vld [vmem:[#allocation2 + $0x2d0] sm:$0xff]
    %v120 = vld [vmem:[#allocation2 + $0x2d8] sm:$0xff]
    %v121 = vld [vmem:[#allocation2 + $0x2e0] sm:$0xff]
    %v122 = vld [vmem:[#allocation2 + $0x2e8] sm:$0xff]
    %v123 = vld [vmem:[#allocation2 + $0x2f0] sm:$0xff]
    %v124 = vld [vmem:[#allocation2 + $0x2f8] sm:$0xff]
    %v125 = vld [vmem:[#allocation2 + $0x300] sm:$0xff]
    %v126 = vld [vmem:[#allocation2 + $0x308] sm:$0xff]
    %v127 = vld [vmem:[#allocation2 + $0x310] sm:$0xff]
    %v128 = vld [vmem:[#allocation2 + $0x318] sm:$0xff]
    %v129 = vld [vmem:[#allocation2 + $0x320] sm:$0xff]
    %v130 = vld [vmem:[#allocation2 + $0x328] sm:$0xff]
    %v131 = vld [vmem:[#allocation2 + $0x330] sm:$0xff]
    %v132 = vld [vmem:[#allocation2 + $0x338] sm:$0xff]
    %v133 = vld [vmem:[#allocation2 + $0x340] sm:$0xff]
    %v134 = vld [vmem:[#allocation2 + $0x348] sm:$0xff]
    %v135 = vld [vmem:[#allocation2 + $0x350] sm:$0xff]
    %v136 = vld [vmem:[#allocation2 + $0x358] sm:$0xff]
    %v137 = vld [vmem:[#allocation2 + $0x360] sm:$0xff]
    %v138 = vld [vmem:[#allocation2 + $0x368] sm:$0xff]
    %v139 = vld [vmem:[#allocation2 + $0x370] sm:$0xff]
    %v140 = vld [vmem:[#allocation2 + $0x378] sm:$0xff]
    %v141 = vld [vmem:[#allocation2 + $0x380] sm:$0xff]
    %v142 = vld [vmem:[#allocation2 + $0x388] sm:$0xff]
    %v143 = vld [vmem:[#allocation2 + $0x390] sm:$0xff]
    %v144 = vld [vmem:[#allocation2 + $0x398] sm:$0xff]
    %v145 = vld [vmem:[#allocation2 + $0x3a0] sm:$0xff]
    %v146 = vld [vmem:[#allocation2 + $0x3a8] sm:$0xff]
    %v147 = vld [vmem:[#allocation2 + $0x3b0] sm:$0xff]
    %v148 = vld [vmem:[#allocation2 + $0x3b8] sm:$0xff]
    %v149 = vld [vmem:[#allocation2 + $0x3c0] sm:$0xff]
    %v150 = vld [vmem:[#allocation2 + $0x3c8] sm:$0xff]
    %v151 = vld [vmem:[#allocation2 + $0x3d0] sm:$0xff]
    %v152 = vld [vmem:[#allocation2 + $0x3d8] sm:$0xff]
    %v153 = vld [vmem:[#allocation2 + $0x3e0] sm:$0xff]
    %v154 = vld [vmem:[#allocation2 + $0x3e8] sm:$0xff]
    %v155 = vld [vmem:[#allocation2 + $0x3f0] sm:$0xff]
    %v156 = vld [vmem:[#allocation2 + $0x3f8] sm:$0xff]
    %v157 = vld [vmem:[%s2] sm:$0xff]
    %v159 = vlaneseq
    %v160 = vshrl.u32 %v159, 7
    %v161 = vsub.s32 0, %v160
    %v162 = vrot.slane %v157, %v161
    %v163 = vlaneseq
    %v164 = vshrl.u32 %v163, 7
    %v165 = vsub.s32 1, %v164
    %v166 = vrot.slane %v157, %v165
    %v167 = vlaneseq
    %v168 = vshrl.u32 %v167, 7
    %v169 = vsub.s32 2, %v168
    %v170 = vrot.slane %v157, %v169
    %v171 = vlaneseq
    %v172 = vshrl.u32 %v171, 7
    %v173 = vsub.s32 3, %v172
    %v174 = vrot.slane %v157, %v173
    %v175 = vlaneseq
    %v176 = vshrl.u32 %v175, 7
    %v177 = vsub.s32 4, %v176
    %v178 = vrot.slane %v157, %v177
    %v179 = vlaneseq
    %v180 = vshrl.u32 %v179, 7
    %v181 = vsub.s32 5, %v180
    %v182 = vrot.slane %v157, %v181
    %v183 = vlaneseq
    %v184 = vshrl.u32 %v183, 7
    %v185 = vsub.s32 6, %v184
    %v186 = vrot.slane %v157, %v185
    %v187 = vlaneseq
    %v188 = vshrl.u32 %v187, 7
    %v189 = vsub.s32 7, %v188
    %v190 = vrot.slane %v157, %v189
    %199 = vmatprep.subr.mxu0 %v150
    %200 = vmatpush1.msra.mxu0 %v149
    %201 = vmatprep.subr.mxu0 %v142
    %202 = vmatpush1.msra.mxu0 %v141
    %203 = vmatprep.subr.mxu0 %v134
    %204 = vmatpush1.msra.mxu0 %v133
    %205 = vmatprep.subr.mxu0 %v126
    %206 = vmatpush1.msra.mxu0 %v125
    %207 = vmatprep.subr.mxu0 %v118
    %208 = vmatpush1.msra.mxu0 %v117
    %209 = vmatprep.subr.mxu0 %v110
    %210 = vmatpush1.msra.mxu0 %v109
    %211 = vmatprep.subr.mxu0 %v102
    %212 = vmatpush1.msra.mxu0 %v101
    %213 = vmatprep.subr.mxu0 %v94
    %214 = vmatpush1.msra.mxu0 %v93
    %215 = vmatprep.subr.mxu0 %v86
    %216 = vmatpush1.msra.mxu0 %v85
    %217 = vmatprep.subr.mxu0 %v78
    %218 = vmatpush1.msra.mxu0 %v77
    %219 = vmatprep.subr.mxu0 %v70
    %220 = vmatpush1.msra.mxu0 %v69
    %221 = vmatprep.subr.mxu0 %v62
    %222 = vmatpush1.msra.mxu0 %v61
    %223 = vmatprep.subr.mxu0 %v54
    %224 = vmatpush1.msra.mxu0 %v53
    %225 = vmatprep.subr.mxu0 %v46
    %226 = vmatpush1.msra.mxu0 %v45
    %227 = vmatprep.subr.mxu0 %v38
    %228 = vmatpush1.msra.mxu0 %v37
    %229 = vmatprep.subr.mxu0 %v30
    %230 = vmatpush1.msra.mxu0 %v29
    %231 = vmatprep.subr.mxu0 0.0
    %232 = vmatpush2.msra.mxu0 0.0
    %233 = vmatprep.subr.mxu0 0.0
    %234 = vmatpush2.msra.mxu0 0.0
    %235 = vmatprep.subr.mxu0 0.0
    %236 = vmatpush2.msra.mxu0 0.0
    %237 = vmatprep.subr.mxu0 0.0
    %238 = vmatpush2.msra.mxu0 0.0
    %239 = vmatprep.subr.mxu0 0.0
    %240 = vmatpush2.msra.mxu0 0.0
    %241 = vmatprep.subr.mxu0 0.0
    %242 = vmatpush2.msra.mxu0 0.0
    %243 = vmatprep.subr.mxu0 0.0
    %244 = vmatpush2.msra.mxu0 0.0
    %245 = vmatprep.subr.mxu0 0.0
    %246 = vmatpush2.msra.mxu0 0.0
    %247 = vmatprep.subr.mxu0 0.0
    %248 = vmatpush2.msra.mxu0 0.0
    %249 = vmatprep.subr.mxu0 0.0
    %250 = vmatpush2.msra.mxu0 0.0
    %251 = vmatprep.subr.mxu0 0.0
    %252 = vmatpush2.msra.mxu0 0.0
    %253 = vmatprep.subr.mxu0 0.0
    %254 = vmatpush2.msra.mxu0 0.0
    %255 = vmatprep.subr.mxu0 0.0
    %256 = vmatpush2.msra.mxu0 0.0
    %257 = vmatprep.subr.mxu0 0.0
    %258 = vmatpush2.msra.mxu0 0.0
    %259 = vmatprep.subr.mxu0 0.0
    %260 = vmatpush2.msra.mxu0 0.0
    %261 = vmatprep.subr.mxu0 0.0
    %262 = vmatpush2.msra.mxu0 0.0
    %263 = vmatprep.mubr.f32.mxu0 0.0
    %264 = vmatmul.mubr.f32.gmra.mxu0 %v28
    %v265 = vpop.f32.mrf.mxu0
    %v266 = vadd.f32 %v162, %v265
    %v267 = vpop.f32.mrf.mxu0
    %v268 = vadd.f32 %v166, %v267
    %269 = vdwg.mxu0
    %270 = vmatprep.subr.mxu0 %v152
    %271 = vmatpush1.msra.mxu0 %v151
    %272 = vmatprep.subr.mxu0 %v144
    %273 = vmatpush1.msra.mxu0 %v143
    %274 = vmatprep.subr.mxu0 %v136
    %275 = vmatpush1.msra.mxu0 %v135
    %276 = vmatprep.subr.mxu0 %v128
    %277 = vmatpush1.msra.mxu0 %v127
    %278 = vmatprep.subr.mxu0 %v120
    %279 = vmatpush1.msra.mxu0 %v119
    %280 = vmatprep.subr.mxu0 %v112
    %281 = vmatpush1.msra.mxu0 %v111
    %282 = vmatprep.subr.mxu0 %v104
    %283 = vmatpush1.msra.mxu0 %v103
    %284 = vmatprep.subr.mxu0 %v96
    %285 = vmatpush1.msra.mxu0 %v95
    %286 = vmatprep.subr.mxu0 %v88
    %287 = vmatpush1.msra.mxu0 %v87
    %288 = vmatprep.subr.mxu0 %v80
    %289 = vmatpush1.msra.mxu0 %v79
    %290 = vmatprep.subr.mxu0 %v72
    %291 = vmatpush1.msra.mxu0 %v71
    %292 = vmatprep.subr.mxu0 %v64
    %293 = vmatpush1.msra.mxu0 %v63
    %294 = vmatprep.subr.mxu0 %v56
    %295 = vmatpush1.msra.mxu0 %v55
    %296 = vmatprep.subr.mxu0 %v48
    %297 = vmatpush1.msra.mxu0 %v47
    %298 = vmatprep.subr.mxu0 %v40
    %299 = vmatpush1.msra.mxu0 %v39
    %300 = vmatprep.subr.mxu0 %v32
    %301 = vmatpush1.msra.mxu0 %v31
    %302 = vmatprep.subr.mxu0 0.0
    %303 = vmatpush2.msra.mxu0 0.0
    %304 = vmatprep.subr.mxu0 0.0
    %305 = vmatpush2.msra.mxu0 0.0
    %306 = vmatprep.subr.mxu0 0.0
    %307 = vmatpush2.msra.mxu0 0.0
    %308 = vmatprep.subr.mxu0 0.0
    %309 = vmatpush2.msra.mxu0 0.0
    %310 = vmatprep.subr.mxu0 0.0
    %311 = vmatpush2.msra.mxu0 0.0
    %312 = vmatprep.subr.mxu0 0.0
    %313 = vmatpush2.msra.mxu0 0.0
    %314 = vmatprep.subr.mxu0 0.0
    %315 = vmatpush2.msra.mxu0 0.0
    %316 = vmatprep.subr.mxu0 0.0
    %317 = vmatpush2.msra.mxu0 0.0
    %318 = vmatprep.subr.mxu0 0.0
    %319 = vmatpush2.msra.mxu0 0.0
    %320 = vmatprep.subr.mxu0 0.0
    %321 = vmatpush2.msra.mxu0 0.0
    %322 = vmatprep.subr.mxu0 0.0
    %323 = vmatpush2.msra.mxu0 0.0
    %324 = vmatprep.subr.mxu0 0.0
    %325 = vmatpush2.msra.mxu0 0.0
    %326 = vmatprep.subr.mxu0 0.0
    %327 = vmatpush2.msra.mxu0 0.0
    %328 = vmatprep.subr.mxu0 0.0
    %329 = vmatpush2.msra.mxu0 0.0
    %330 = vmatprep.subr.mxu0 0.0
    %331 = vmatpush2.msra.mxu0 0.0
    %332 = vmatprep.subr.mxu0 0.0
    %333 = vmatpush2.msra.mxu0 0.0
    %334 = vmatprep.mubr.f32.mxu0 0.0
    %335 = vmatmul.mubr.f32.gmra.mxu0 %v28
    %v336 = vpop.f32.mrf.mxu0
    %v337 = vadd.f32 %v170, %v336
    %v338 = vpop.f32.mrf.mxu0
    %v339 = vadd.f32 %v174, %v338
    %340 = vdwg.mxu0
    %341 = vmatprep.subr.mxu0 %v154
    %342 = vmatpush1.msra.mxu0 %v153
    %343 = vmatprep.subr.mxu0 %v146
    %344 = vmatpush1.msra.mxu0 %v145
    %345 = vmatprep.subr.mxu0 %v138
    %346 = vmatpush1.msra.mxu0 %v137
    %347 = vmatprep.subr.mxu0 %v130
    %348 = vmatpush1.msra.mxu0 %v129
    %349 = vmatprep.subr.mxu0 %v122
    %350 = vmatpush1.msra.mxu0 %v121
    %351 = vmatprep.subr.mxu0 %v114
    %352 = vmatpush1.msra.mxu0 %v113
    %353 = vmatprep.subr.mxu0 %v106
    %354 = vmatpush1.msra.mxu0 %v105
    %355 = vmatprep.subr.mxu0 %v98
    %356 = vmatpush1.msra.mxu0 %v97
    %357 = vmatprep.subr.mxu0 %v90
    %358 = vmatpush1.msra.mxu0 %v89
    %359 = vmatprep.subr.mxu0 %v82
    %360 = vmatpush1.msra.mxu0 %v81
    %361 = vmatprep.subr.mxu0 %v74
    %362 = vmatpush1.msra.mxu0 %v73
    %363 = vmatprep.subr.mxu0 %v66
    %364 = vmatpush1.msra.mxu0 %v65
    %365 = vmatprep.subr.mxu0 %v58
    %366 = vmatpush1.msra.mxu0 %v57
    %367 = vmatprep.subr.mxu0 %v50
    %368 = vmatpush1.msra.mxu0 %v49
    %369 = vmatprep.subr.mxu0 %v42
    %370 = vmatpush1.msra.mxu0 %v41
    %371 = vmatprep.subr.mxu0 %v34
    %372 = vmatpush1.msra.mxu0 %v33
    %373 = vmatprep.subr.mxu0 0.0
    %374 = vmatpush2.msra.mxu0 0.0
    %375 = vmatprep.subr.mxu0 0.0
    %376 = vmatpush2.msra.mxu0 0.0
    %377 = vmatprep.subr.mxu0 0.0
    %378 = vmatpush2.msra.mxu0 0.0
    %379 = vmatprep.subr.mxu0 0.0
    %380 = vmatpush2.msra.mxu0 0.0
    %381 = vmatprep.subr.mxu0 0.0
    %382 = vmatpush2.msra.mxu0 0.0
    %383 = vmatprep.subr.mxu0 0.0
    %384 = vmatpush2.msra.mxu0 0.0
    %385 = vmatprep.subr.mxu0 0.0
    %386 = vmatpush2.msra.mxu0 0.0
    %387 = vmatprep.subr.mxu0 0.0
    %388 = vmatpush2.msra.mxu0 0.0
    %389 = vmatprep.subr.mxu0 0.0
    %390 = vmatpush2.msra.mxu0 0.0
    %391 = vmatprep.subr.mxu0 0.0
    %392 = vmatpush2.msra.mxu0 0.0
    %393 = vmatprep.subr.mxu0 0.0
    %394 = vmatpush2.msra.mxu0 0.0
    %395 = vmatprep.subr.mxu0 0.0
    %396 = vmatpush2.msra.mxu0 0.0
    %397 = vmatprep.subr.mxu0 0.0
    %398 = vmatpush2.msra.mxu0 0.0
    %399 = vmatprep.subr.mxu0 0.0
    %400 = vmatpush2.msra.mxu0 0.0
    %401 = vmatprep.subr.mxu0 0.0
    %402 = vmatpush2.msra.mxu0 0.0
    %403 = vmatprep.subr.mxu0 0.0
    %404 = vmatpush2.msra.mxu0 0.0
    %405 = vmatprep.mubr.f32.mxu0 0.0
    %406 = vmatmul.mubr.f32.gmra.mxu0 %v28
    %v407 = vpop.f32.mrf.mxu0
    %v408 = vadd.f32 %v178, %v407
    %v409 = vpop.f32.mrf.mxu0
    %v410 = vadd.f32 %v182, %v409
    %411 = vdwg.mxu0
    %412 = vmatprep.subr.mxu0 %v156
    %413 = vmatpush1.msra.mxu0 %v155
    %414 = vmatprep.subr.mxu0 %v148
    %415 = vmatpush1.msra.mxu0 %v147
    %416 = vmatprep.subr.mxu0 %v140
    %417 = vmatpush1.msra.mxu0 %v139
    %418 = vmatprep.subr.mxu0 %v132
    %419 = vmatpush1.msra.mxu0 %v131
    %420 = vmatprep.subr.mxu0 %v124
    %421 = vmatpush1.msra.mxu0 %v123
    %422 = vmatprep.subr.mxu0 %v116
    %423 = vmatpush1.msra.mxu0 %v115
    %424 = vmatprep.subr.mxu0 %v108
    %425 = vmatpush1.msra.mxu0 %v107
    %426 = vmatprep.subr.mxu0 %v100
    %427 = vmatpush1.msra.mxu0 %v99
    %428 = vmatprep.subr.mxu0 %v92
    %429 = vmatpush1.msra.mxu0 %v91
    %430 = vmatprep.subr.mxu0 %v84
    %431 = vmatpush1.msra.mxu0 %v83
    %432 = vmatprep.subr.mxu0 %v76
    %433 = vmatpush1.msra.mxu0 %v75
    %434 = vmatprep.subr.mxu0 %v68
    %435 = vmatpush1.msra.mxu0 %v67
    %436 = vmatprep.subr.mxu0 %v60
    %437 = vmatpush1.msra.mxu0 %v59
    %438 = vmatprep.subr.mxu0 %v52
    %439 = vmatpush1.msra.mxu0 %v51
    %440 = vmatprep.subr.mxu0 %v44
    %441 = vmatpush1.msra.mxu0 %v43
    %442 = vmatprep.subr.mxu0 %v36
    %443 = vmatpush1.msra.mxu0 %v35
    %444 = vmatprep.subr.mxu0 0.0
    %445 = vmatpush2.msra.mxu0 0.0
    %446 = vmatprep.subr.mxu0 0.0
    %447 = vmatpush2.msra.mxu0 0.0
    %448 = vmatprep.subr.mxu0 0.0
    %449 = vmatpush2.msra.mxu0 0.0
    %450 = vmatprep.subr.mxu0 0.0
    %451 = vmatpush2.msra.mxu0 0.0
    %452 = vmatprep.subr.mxu0 0.0
    %453 = vmatpush2.msra.mxu0 0.0
    %454 = vmatprep.subr.mxu0 0.0
    %455 = vmatpush2.msra.mxu0 0.0
    %456 = vmatprep.subr.mxu0 0.0
    %457 = vmatpush2.msra.mxu0 0.0
    %458 = vmatprep.subr.mxu0 0.0
    %459 = vmatpush2.msra.mxu0 0.0
    %460 = vmatprep.subr.mxu0 0.0
    %461 = vmatpush2.msra.mxu0 0.0
    %462 = vmatprep.subr.mxu0 0.0
    %463 = vmatpush2.msra.mxu0 0.0
    %464 = vmatprep.subr.mxu0 0.0
    %465 = vmatpush2.msra.mxu0 0.0
    %466 = vmatprep.subr.mxu0 0.0
    %467 = vmatpush2.msra.mxu0 0.0
    %468 = vmatprep.subr.mxu0 0.0
    %469 = vmatpush2.msra.mxu0 0.0
    %470 = vmatprep.subr.mxu0 0.0
    %471 = vmatpush2.msra.mxu0 0.0
    %472 = vmatprep.subr.mxu0 0.0
    %473 = vmatpush2.msra.mxu0 0.0
    %474 = vmatprep.subr.mxu0 0.0
    %475 = vmatpush2.msra.mxu0 0.0
    %476 = vmatprep.mubr.f32.mxu0 0.0
    %477 = vmatmul.mubr.f32.gmra.mxu0 %v28
    %v478 = vpop.f32.mrf.mxu0
    %v479 = vadd.f32 %v186, %v478
    %v480 = vpop.f32.mrf.mxu0
    %v481 = vadd.f32 %v190, %v480
    %482 = vdwg.mxu0
    %v483 = vmul.f32 %v266, 0.16666667
    %v484 = vmul.f32 %v268, 0.16666667
    %v485 = vmul.f32 %v337, 0.16666667
    %v486 = vmul.f32 %v339, 0.16666667
    %v487 = vmul.f32 %v408, 0.16666667
    %v488 = vmul.f32 %v410, 0.16666667
    %v489 = vmul.f32 %v479, 0.16666667
    %v490 = vmul.f32 %v481, 0.16666667
    %v491 = vadd.f32 %v483, 0.5
    %v492 = vadd.f32 %v484, 0.5
    %v493 = vadd.f32 %v485, 0.5
    %v494 = vadd.f32 %v486, 0.5
    %v495 = vadd.f32 %v487, 0.5
    %v496 = vadd.f32 %v488, 0.5
    %v497 = vadd.f32 %v489, 0.5
    %v498 = vadd.f32 %v490, 0.5
    %v499 = vmax.f32 %v491, 0.0
    %v500 = vmax.f32 %v492, 0.0
    %v501 = vmax.f32 %v493, 0.0
    %v502 = vmax.f32 %v494, 0.0
    %v503 = vmax.f32 %v495, 0.0
    %v504 = vmax.f32 %v496, 0.0
    %v505 = vmax.f32 %v497, 0.0
    %v506 = vmax.f32 %v498, 0.0
    %v507 = vmin.f32 %v499, 1.0
    %v508 = vmin.f32 %v500, 1.0
    %v509 = vmin.f32 %v501, 1.0
    %v510 = vmin.f32 %v502, 1.0
    %v511 = vmin.f32 %v503, 1.0
    %v512 = vmin.f32 %v504, 1.0
    %v513 = vmin.f32 %v505, 1.0
    %v514 = vmin.f32 %v506, 1.0
    %v515 = vmul.f32 %v266, %v507
    %v516 = vmul.f32 %v268, %v508
    %v517 = vmul.f32 %v337, %v509
    %v518 = vmul.f32 %v339, %v510
    %v519 = vmul.f32 %v408, %v511
    %v520 = vmul.f32 %v410, %v512
    %v521 = vmul.f32 %v479, %v513
    %v522 = vmul.f32 %v481, %v514
    %523 = vst [vmem:[%s3] sm:$0xff] %v515
    %524 = vst [vmem:[%s3 + $0x8] sm:$0xff] %v516
    %525 = vst [vmem:[%s3 + $0x10] sm:$0xff] %v517
    %526 = vst [vmem:[%s3 + $0x18] sm:$0xff] %v518
    %527 = vst [vmem:[%s3 + $0x20] sm:$0xff] %v519
    %528 = vst [vmem:[%s3 + $0x28] sm:$0xff] %v520
    %529 = vst [vmem:[%s3 + $0x30] sm:$0xff] %v521
    %530 = vst [vmem:[%s3 + $0x38] sm:$0xff] %v522
    // Predicated region
    $region18: #{linear_hardswish.1} parent=1 // pred_check
      _
    $region19: #{linear_hardswish.1} parent=1 // pred_check_branch
      %532 = sbr.rel (0) target = $region21
    $region20: #{linear_hardswish.1} parent=1 // pred_region
      _
    $region21: #{linear_hardswish.1} parent=1 // pred_fallthru
      _
    // Predicated region
    $region22: #{linear_hardswish.1} parent=1 // pred_check
      _
    $region23: #{linear_hardswish.1} parent=1 // pred_check_branch
      %534 = sbr.rel (0) target = $region25
    $region24: #{linear_hardswish.1} parent=1 // pred_region
      _
    $region25: #{linear_hardswish.1} parent=1 // pred_fallthru
      _
    %535 = vsyncpa [#allocation3], 1

</llo_original>
